<compile_context>
chip_gen: v7x
topology: tpu7x:2x2x1
jax: 0.10.0
libtpu: 0.0.40
codegen_flags: <defaults>
</compile_context>

<pallas_src>
import functools

import jax
import jax.numpy as jnp
from jax.experimental import pallas as pl
from jax.experimental.pallas import tpu as pltpu

_MiB = 1024 * 1024


# --------------------------------------------------------------------------
# Generation-aware hardware queries (best-effort, with safe fallbacks).
# --------------------------------------------------------------------------
def _device_kind():
    try:
        return jax.devices()[0].device_kind.lower()
    except Exception:
        return ""


def _physical_vmem_bytes():
    try:
        info = pltpu.get_tpu_info()
        cap = getattr(info, "vmem_capacity_bytes", None)
        if cap:
            return int(cap)
    except Exception:
        pass
    # v7x has 64 MiB/TC; v5e/v6e have 128 MiB.
    return 64 * _MiB if "v7" in _device_kind() else 128 * _MiB


def _default_transcendental_dtype():
    kind = _device_kind()
    # bf16 VPU/EUP exist on v6e (Trillium) and v7x; older gens (<= v5e) don't.
    if "v6" in kind or "v7" in kind or "trillium" in kind:
        return jnp.bfloat16
    return jnp.float32


# --------------------------------------------------------------------------
# Kernel bodies.
# --------------------------------------------------------------------------
def _coeff_block(tok, lab, w1t, w3t, b3v, trans_dtype):
    """Class-sum of softmax coefficients for one (bt, ct) block.

    tok : (bt, I, D) f32       lab : (bt, ct, Wd) bf16
    w1t : (Wd, D)   bf16       w3t : (D, D)  bf16      b3v : (1, D) f32
    returns (bt, I, D) f32
    """
    bt, img, dim = tok.shape
    ct = lab.shape[1]

    # fc1 (no bias): single (bt*ct, Wd) @ (Wd, D) MXU matmul, f32 accumulation.
    lab_proj = jnp.dot(lab.reshape(bt * ct, lab.shape[-1]), w1t,
                       preferred_element_type=jnp.float32)
    lab_proj = lab_proj.reshape(bt, ct, 1, dim)

    # Broadcast product + tanh in class-leading layout: (bt, ct, I, D).
    # tanh runs on the EUP in trans_dtype (bf16 on v6e/v7x, f32 on v5e).
    e = jnp.tanh((lab_proj * tok[:, None, :, :]).astype(trans_dtype))

    # fc3: one tall (bt*ct*I, D) @ (D, D) bf16 matmul (leading-dim reshape only).
    f = jnp.dot(e.reshape(bt * ct * img, dim).astype(w3t.dtype), w3t,
                preferred_element_type=jnp.float32)
    f = f.reshape(bt, ct, img, dim) + b3v

    # Softmax over the imgSize axis (axis=2 -> sublane/XLU reductions).  The
    # full I extent is resident in this block, so a plain softmax is exact.
    m = jnp.max(f, axis=2, keepdims=True)                    # (bt, ct, 1, D)
    p = jnp.exp((f - m).astype(trans_dtype)).astype(jnp.float32)
    z = jnp.sum(p, axis=2, keepdims=True)                    # (bt, ct, 1, D)
    s = p * pl.reciprocal(z, approx=True)                    # (bt, ct, I, D)

    # Class-sum of the coefficients (the token factors out of this sum).
    return jnp.sum(s, axis=1)                                # (bt, I, D)


def _kernel_single(tok_ref, lab_ref, w1t_ref, w3t_ref, b3_ref, out_ref, *,
                   trans_dtype):
    # Single class step: no coeff scratch, no init/finalize phases.
    tok = tok_ref[...].astype(jnp.float32)
    coeff = _coeff_block(tok, lab_ref[...], w1t_ref[...], w3t_ref[...],
                         b3_ref[...], trans_dtype)
    out_ref[...] = (tok * coeff).astype(out_ref.dtype)


def _kernel_multi(tok_ref, lab_ref, w1t_ref, w3t_ref, b3_ref, out_ref,
                  coeff_ref, *, trans_dtype):
    # Class axis tiled: accumulate the class-sum in a persistent f32 scratch.
    c_idx = pl.program_id(1)

    @pl.when(c_idx == 0)
    def _():
        coeff_ref[...] = jnp.zeros_like(coeff_ref)

    tok = tok_ref[...].astype(jnp.float32)
    coeff_ref[...] += _coeff_block(tok, lab_ref[...], w1t_ref[...],
                                   w3t_ref[...], b3_ref[...], trans_dtype)

    @pl.when(c_idx == pl.num_programs(1) - 1)
    def _():
        out_ref[...] = (tok * coeff_ref[...]).astype(out_ref.dtype)


# --------------------------------------------------------------------------
# Tiling heuristics.
# --------------------------------------------------------------------------
def _pick_bt(B, I):
    """Batch tile: amortize per-grid-step overhead for small I while keeping
    >= 2 parallel grid steps (megacore sharding on multi-TC chips)."""
    cands = [bt for bt in range(1, B + 1) if B % bt == 0 and bt * I <= 512]
    par = [bt for bt in cands if B // bt >= 2]
    pool = par or cands or [1]
    return max(pool)


def _vmem_usage(bt, ct, I, D, Wd, n_class_steps, in_bytes, lab_bytes, w_bytes,
                trans_bytes):
    """Approximate VMEM residency for one grid step."""
    fixed = (2 * bt * I * D * in_bytes          # token blocks (double-buffered)
             + 2 * bt * I * D * in_bytes        # output blocks (double-buffered)
             + 2 * (Wd * D + D * D) * w_bytes   # weights (pipeline 2x-buffers)
             + 2 * D * 4)                       # bias
    scratch = bt * I * D * 4 if n_class_steps > 1 else 0
    lab_blk = 2 * bt * ct * Wd * lab_bytes
    # Live intermediates: e/p in trans dtype, f/s in f32.
    live = bt * ct * I * D * (2 * 4 + 2 * trans_bytes)
    return fixed + scratch + lab_blk + live


def _pick_ct(bt, I, C, D, Wd, budget, in_bytes, lab_bytes, w_bytes, trans_bytes):
    """Largest class tile whose estimated residency fits the VMEM budget;
    prefer full C (drops the class grid axis) or multiple-of-8 tiles."""
    def fits(ct, steps):
        return _vmem_usage(bt, ct, I, D, Wd, steps, in_bytes, lab_bytes,
                           w_bytes, trans_bytes) <= budget

    if fits(C, 1):
        return C
    good = [ct for ct in range(8, C, 8) if C % ct == 0 and fits(ct, 2)]
    if good:
        return max(good)
    anyd = [ct for ct in range(1, C) if C % ct == 0 and fits(ct, 2)]
    return max(anyd) if anyd else 1


# --------------------------------------------------------------------------
# Wrapper.
# --------------------------------------------------------------------------
def decoupling_semantic(token, label_graph, w1, w3, b3, *, bt=None, ct=None,
                        mxu_dtype=jnp.bfloat16, trans_dtype=None,
                        vmem_limit_bytes=None, vmem_budget_bytes=None):
    """token: (B, I, D); label_graph: (B, C, Wd); w1: (D, Wd); w3: (D, D); b3: (D,)."""
    B, I, D = token.shape
    _, C, Wd = label_graph.shape
    assert w1.shape == (D, Wd) and w3.shape == (D, D) and b3.shape == (D,)

    if trans_dtype is None:
        trans_dtype = _default_transcendental_dtype()

    # Generation-aware VMEM caps (v5e/v6e: 128 MiB physical, v7x: 64 MiB).
    phys = _physical_vmem_bytes()
    if vmem_limit_bytes is None:
        if phys >= 128 * _MiB:
            vmem_limit_bytes = 100 * _MiB
        else:
            vmem_limit_bytes = max(phys - 12 * _MiB, 32 * _MiB)
    if vmem_budget_bytes is None:
        vmem_budget_bytes = int(vmem_limit_bytes * 0.8)

    in_bytes = jnp.dtype(token.dtype).itemsize
    lab_bytes = jnp.dtype(mxu_dtype).itemsize
    w_bytes = jnp.dtype(mxu_dtype).itemsize
    trans_bytes = jnp.dtype(trans_dtype).itemsize

    if bt is None:
        bt = _pick_bt(B, I)
    if ct is None:
        ct = _pick_ct(bt, I, C, D, Wd, vmem_budget_bytes, in_bytes, lab_bytes,
                      w_bytes, trans_bytes)
    assert B % bt == 0 and C % ct == 0

    # MXU operands in bf16 (bf16-native MXUs on all gens), f32 accumulation.
    w1t = jnp.transpose(w1).astype(mxu_dtype)       # (Wd, D)
    w3t = jnp.transpose(w3).astype(mxu_dtype)       # (D, D)
    lab = label_graph.astype(mxu_dtype)             # (B, C, Wd)
    b3_2d = b3.reshape(1, D).astype(jnp.float32)

    # Advisory cost estimate so XLA can overlap neighbouring ops.
    flops = 2 * B * C * Wd * D + 2 * B * C * I * D * D + 6 * B * C * I * D
    transcendentals = 2 * B * C * I * D            # one tanh + one exp / element
    bytes_accessed = (token.size * in_bytes + lab.size * lab_bytes
                      + w1t.size * w_bytes + w3t.size * w_bytes
                      + b3_2d.size * 4 + B * I * D * in_bytes)
    cost = pl.CostEstimate(flops=flops, transcendentals=transcendentals,
                           bytes_accessed=bytes_accessed)

    n_class_steps = C // ct
    if n_class_steps == 1:
        # Fast path: whole class range resident -> no scratch, no accumulation
        # pass, single fully-"parallel" grid axis.
        grid_spec = pltpu.PrefetchScalarGridSpec(
            num_scalar_prefetch=0,
            grid=(B // bt,),
            in_specs=[
                pl.BlockSpec((bt, I, D), lambda b: (b, 0, 0)),     # token
                pl.BlockSpec((bt, C, Wd), lambda b: (b, 0, 0)),    # labelGraph
                pl.BlockSpec((Wd, D), lambda b: (0, 0)),           # fc1 W^T
                pl.BlockSpec((D, D), lambda b: (0, 0)),            # fc3 W^T
                pl.BlockSpec((1, D), lambda b: (0, 0)),            # fc3 bias
            ],
            out_specs=pl.BlockSpec((bt, I, D), lambda b: (b, 0, 0)),
        )
        kernel = functools.partial(_kernel_single, trans_dtype=trans_dtype)
        semantics = ("parallel",)
    else:
        grid_spec = pltpu.PrefetchScalarGridSpec(
            num_scalar_prefetch=0,
            grid=(B // bt, n_class_steps),
            in_specs=[
                pl.BlockSpec((bt, I, D), lambda b, c: (b, 0, 0)),     # token
                pl.BlockSpec((bt, ct, Wd), lambda b, c: (b, c, 0)),   # labelGraph
                pl.BlockSpec((Wd, D), lambda b, c: (0, 0)),           # fc1 W^T
                pl.BlockSpec((D, D), lambda b, c: (0, 0)),            # fc3 W^T
                pl.BlockSpec((1, D), lambda b, c: (0, 0)),            # fc3 bias
            ],
            out_specs=pl.BlockSpec((bt, I, D), lambda b, c: (b, 0, 0)),
            scratch_shapes=[pltpu.VMEM((bt, I, D), jnp.float32)],     # coeff acc
        )
        kernel = functools.partial(_kernel_multi, trans_dtype=trans_dtype)
        semantics = ("parallel", "arbitrary")

    return pl.pallas_call(
        kernel,
        out_shape=jax.ShapeDtypeStruct((B, I, D), token.dtype),
        grid_spec=grid_spec,
        cost_estimate=cost,
        compiler_params=pltpu.CompilerParams(
            dimension_semantics=semantics,
            vmem_limit_bytes=int(vmem_limit_bytes),
        ),
    )(token, lab, w1t, w3t, b3_2d)


def _reference(token, label_graph, w1, w3, b3):
    # Pure-JAX mirror of the PyTorch forward for validation (f32 throughout).
    lab_proj = jnp.einsum("bcw,dw->bcd", label_graph, w1)            # fc1
    e = jnp.tanh(token[:, :, None, :] * lab_proj[:, None, :, :])     # (B,I,C,D)
    f = jnp.einsum("bicd,ed->bice", e, w3) + b3                      # fc3
    s = jax.nn.softmax(f, axis=1)                                    # over imgSize
    return jnp.sum(token[:, :, None, :] * s, axis=2)                 # sum classes


if __name__ == "__main__":
    # Small but lane-aligned shapes (D multiple of 128 -> dense MXU/stores).
    B, I, D = 2, 16, 128        # batch, imgSize, imgFeatureDim (== intermediaDim)
    C, Wd = 8, 32               # classNum, wordFeatureDim

    key = jax.random.PRNGKey(0)
    k1, k2, k3, k4, k5 = jax.random.split(key, 5)
    token = jax.random.normal(k1, (B, I, D), dtype=jnp.float32)
    label_graph = jax.random.normal(k2, (B, C, Wd), dtype=jnp.float32)
    # fc1: Linear(Wd -> D, bias=False); fc3: Linear(D -> D)
    w1 = jax.random.normal(k3, (D, Wd), dtype=jnp.float32) * 0.1
    w3 = jax.random.normal(k4, (D, D), dtype=jnp.float32) * 0.1
    b3 = jax.random.normal(k5, (D,), dtype=jnp.float32) * 0.1

    out = decoupling_semantic(token, label_graph, w1, w3, b3)
    out = jax.block_until_ready(out)

    ref = _reference(token, label_graph, w1, w3, b3)
    assert out.shape == (B, I, D)
    # bf16 MXU inputs + (on v6e/v7x) bf16 tanh/exp + approx EUP reciprocal in
    # the softmax -> relaxed tolerance vs the f32 reference.
    assert jnp.allclose(out, ref, atol=2e-2, rtol=2e-2), "mismatch vs reference"

    print("KERNEL_OK")
</pallas_src>

<mosaic_0001>
module attributes {stable_mosaic.version = 11 : i64} {
  func.func @_kernel_single(%arg0: i32, %arg1: memref<1x16x128xf32, #tpu.memory_space<vmem>>, %arg2: memref<1x8x32xbf16, #tpu.memory_space<vmem>>, %arg3: memref<32x128xbf16, #tpu.memory_space<vmem>>, %arg4: memref<128x128xbf16, #tpu.memory_space<vmem>>, %arg5: memref<1x128xf32, #tpu.memory_space<vmem>>, %arg6: memref<1x16x128xf32, #tpu.memory_space<vmem>>) attributes {dimension_semantics = [#tpu.dimension_semantics<parallel>], iteration_bounds = array<i64: 2>, scalar_prefetch = 0 : i64, scratch_operands = 0 : i64, tpu.core_type = #tpu.core_type<tc>, window_params = [{transform_indices = @transform_0, window_bounds = array<i64: 1, 16, 128>}, {transform_indices = @transform_1, window_bounds = array<i64: 1, 8, 32>}, {pipeline_mode = #tpu.pipeline_mode<synchronous>, transform_indices = @transform_2, window_bounds = array<i64: 32, 128>}, {pipeline_mode = #tpu.pipeline_mode<synchronous>, transform_indices = @transform_3, window_bounds = array<i64: 128, 128>}, {pipeline_mode = #tpu.pipeline_mode<synchronous>, transform_indices = @transform_4, window_bounds = array<i64: 1, 128>}, {transform_indices = @transform_5, window_bounds = array<i64: 1, 16, 128>}]} {
    %c0 = arith.constant 0 : index
    %c0_0 = arith.constant 0 : index
    %c0_1 = arith.constant 0 : index
    %0 = vector.load %arg1[%c0, %c0_0, %c0_1] : memref<1x16x128xf32, #tpu.memory_space<vmem>>, vector<1x16x128xf32>
    %c0_2 = arith.constant 0 : index
    %c0_3 = arith.constant 0 : index
    %c0_4 = arith.constant 0 : index
    %1 = vector.load %arg2[%c0_2, %c0_3, %c0_4] : memref<1x8x32xbf16, #tpu.memory_space<vmem>>, vector<1x8x32xbf16>
    %c0_5 = arith.constant 0 : index
    %c0_6 = arith.constant 0 : index
    %2 = vector.load %arg3[%c0_5, %c0_6] : memref<32x128xbf16, #tpu.memory_space<vmem>>, vector<32x128xbf16>
    %c0_7 = arith.constant 0 : index
    %c0_8 = arith.constant 0 : index
    %3 = vector.load %arg4[%c0_7, %c0_8] : memref<128x128xbf16, #tpu.memory_space<vmem>>, vector<128x128xbf16>
    %c0_9 = arith.constant 0 : index
    %c0_10 = arith.constant 0 : index
    %4 = vector.load %arg5[%c0_9, %c0_10] : memref<1x128xf32, #tpu.memory_space<vmem>>, vector<1x128xf32>
    %5 = vector.shape_cast %1 : vector<1x8x32xbf16> to vector<8x32xbf16>
    %cst = arith.constant dense<0.000000e+00> : vector<8x128xf32>
    %6 = tpu.matmul %5, %2, %cst {dimension_numbers = #tpu.dot_dimension_numbers<[1], [0], [0], [1], [0, 0, 1, 1], [], []>} : vector<8x32xbf16>, vector<32x128xbf16>, vector<8x128xf32> -> vector<8x128xf32>
    %7 = vector.shape_cast %6 : vector<8x128xf32> to vector<1x8x1x128xf32>
    %8 = vector.shape_cast %0 : vector<1x16x128xf32> to vector<1x1x16x128xf32>
    %9 = vector.broadcast %7 : vector<1x8x1x128xf32> to vector<1x8x16x128xf32>
    %10 = vector.broadcast %8 : vector<1x1x16x128xf32> to vector<1x8x16x128xf32>
    %11 = arith.mulf %9, %10 : vector<1x8x16x128xf32>
    %12 = math.tanh %11 : vector<1x8x16x128xf32>
    %13 = vector.shape_cast %12 : vector<1x8x16x128xf32> to vector<128x128xf32>
    %14 = arith.truncf %13 : vector<128x128xf32> to vector<128x128xbf16>
    %cst_11 = arith.constant dense<0.000000e+00> : vector<128x128xf32>
    %15 = tpu.matmul %14, %3, %cst_11 {dimension_numbers = #tpu.dot_dimension_numbers<[1], [0], [0], [1], [0, 0, 1, 1], [], []>} : vector<128x128xbf16>, vector<128x128xbf16>, vector<128x128xf32> -> vector<128x128xf32>
    %16 = vector.shape_cast %15 : vector<128x128xf32> to vector<1x8x16x128xf32>
    %17 = vector.shape_cast %4 : vector<1x128xf32> to vector<1x1x1x128xf32>
    %18 = vector.broadcast %17 : vector<1x1x1x128xf32> to vector<1x8x16x128xf32>
    %19 = arith.addf %16, %18 : vector<1x8x16x128xf32>
    %cst_12 = arith.constant dense<0xFF800000> : vector<1x8x128xf32>
    %20 = vector.multi_reduction <maximumf>, %19, %cst_12 [2] : vector<1x8x16x128xf32> to vector<1x8x128xf32>
    %21 = vector.shape_cast %20 : vector<1x8x128xf32> to vector<1x8x1x128xf32>
    %22 = vector.broadcast %21 : vector<1x8x1x128xf32> to vector<1x8x16x128xf32>
    %23 = arith.subf %19, %22 : vector<1x8x16x128xf32>
    %24 = math.exp %23 : vector<1x8x16x128xf32>
    %cst_13 = arith.constant dense<0.000000e+00> : vector<1x8x128xf32>
    %25 = vector.multi_reduction <add>, %24, %cst_13 [2] : vector<1x8x16x128xf32> to vector<1x8x128xf32>
    %26 = vector.shape_cast %25 : vector<1x8x128xf32> to vector<1x8x1x128xf32>
    %27 = tpu.reciprocal %26 {approx = true} : vector<1x8x1x128xf32> -> vector<1x8x1x128xf32>
    %28 = vector.broadcast %27 : vector<1x8x1x128xf32> to vector<1x8x16x128xf32>
    %29 = arith.mulf %24, %28 : vector<1x8x16x128xf32>
    %cst_14 = arith.constant dense<0.000000e+00> : vector<1x16x128xf32>
    %30 = vector.multi_reduction <add>, %29, %cst_14 [1] : vector<1x8x16x128xf32> to vector<1x16x128xf32>
    %31 = arith.mulf %0, %30 : vector<1x16x128xf32>
    %c0_15 = arith.constant 0 : index
    %c0_16 = arith.constant 0 : index
    %c0_17 = arith.constant 0 : index
    %32 = vector.load %arg6[%c0_15, %c0_16, %c0_17] : memref<1x16x128xf32, #tpu.memory_space<vmem>>, vector<1x16x128xf32>
    tpu.vector_store %arg6[%c0_15, %c0_16, %c0_17], %31 {strides = array<i32>} : memref<1x16x128xf32, #tpu.memory_space<vmem>>, vector<1x16x128xf32>,
    return
  }
  func.func @transform_0(%arg0: i32) -> (i32, i32, i32) {
    %c0_i32 = arith.constant 0 : i32
    %c0_i32_0 = arith.constant 0 : i32
    %c0_i32_1 = arith.constant 0 : i32
    return %arg0, %c0_i32, %c0_i32_0 : i32, i32, i32
  }
  func.func @transform_1(%arg0: i32) -> (i32, i32, i32) {
    %c0_i32 = arith.constant 0 : i32
    %c0_i32_0 = arith.constant 0 : i32
    %c0_i32_1 = arith.constant 0 : i32
    return %arg0, %c0_i32, %c0_i32_0 : i32, i32, i32
  }
  func.func @transform_2(%arg0: i32) -> (i32, i32) {
    %c0_i32 = arith.constant 0 : i32
    %c0_i32_0 = arith.constant 0 : i32
    %c0_i32_1 = arith.constant 0 : i32
    return %c0_i32, %c0_i32_0 : i32, i32
  }
  func.func @transform_3(%arg0: i32) -> (i32, i32) {
    %c0_i32 = arith.constant 0 : i32
    %c0_i32_0 = arith.constant 0 : i32
    %c0_i32_1 = arith.constant 0 : i32
    return %c0_i32, %c0_i32_0 : i32, i32
  }
  func.func @transform_4(%arg0: i32) -> (i32, i32) {
    %c0_i32 = arith.constant 0 : i32
    %c0_i32_0 = arith.constant 0 : i32
    %c0_i32_1 = arith.constant 0 : i32
    return %c0_i32, %c0_i32_0 : i32, i32
  }
  func.func @transform_5(%arg0: i32) -> (i32, i32, i32) {
    %c0_i32 = arith.constant 0 : i32
    %c0_i32_0 = arith.constant 0 : i32
    %c0_i32_1 = arith.constant 0 : i32
    return %arg0, %c0_i32, %c0_i32_0 : i32, i32, i32
  }
}

</mosaic_0001>

<llo_original>
// kernel: tpu_custom_call.1
$region0: #{tpu_custom_call.1}
  #allocation0 [shape = 'u32[]', space=smem, size = 0x4, offset = 0x4, fixed_abs, tag = 'smem constant byte address 0x4 - core index']
  #allocation1 [shape = 'u32[144,128]{1,0:T(1,128)}', space=vmem, size = 0x12000, scoped, tag = 'internal scratch']
  %s0 = inlined_call_operand.hbm [shape: f32[2,16,128], index: 0, kind: input, shape index: {}]
  %s1 = inlined_call_operand.hbm [shape: bf16[2,8,32], index: 1, kind: input, shape index: {}]
  %s2 = inlined_call_operand.hbm [shape: bf16[32,128], index: 2, kind: input, shape index: {}]
  %s3 = inlined_call_operand.hbm [shape: bf16[128,128], index: 3, kind: input, shape index: {}]
  %s4 = inlined_call_operand.hbm [shape: f32[1,128], index: 4, kind: input, shape index: {}]
  %s5 = inlined_call_operand.hbm [shape: f32[2,16,128], index: 5, kind: output, shape index: {}]
  %s6 = sld [smem:[#allocation0]]
  $region73: #{tpu_custom_call.1} parent=0
    _
  %s8 = ssub.s32 1, %s6
  %s9 = scalar_select 0, %s8, %s6
  $region1: #{tpu_custom_call.1} parent=0
    #allocation2 [shape = 'u8[16384]{0}', space=vmem, size = 0x4000, scoped, tag = 'input window, operand 0']
    #allocation3 [shape = 's32[2]{0}', space=sflag, size = 0x8, scoped, tag = 'scoped memory for tpu_custom_call.1']
    #allocation4 [shape = 's32[2]{0}', space=sflag, size = 0x8, scoped, tag = 'scoped memory for tpu_custom_call.1']
    #allocation5 [shape = 'u8[4096]{0}', space=vmem, size = 0x1000, scoped, tag = 'input window, operand 1']
    #allocation6 [shape = 's32[2]{0}', space=sflag, size = 0x8, scoped, tag = 'scoped memory for tpu_custom_call.1']
    #allocation7 [shape = 'u8[8192]{0}', space=vmem, size = 0x2000, scoped, tag = 'input window, operand 2, single buffered']
    #allocation8 [shape = 'u8[32768]{0}', space=vmem, size = 0x8000, scoped, tag = 'input window, operand 3, single buffered']
    #allocation9 [shape = 's32[1]{0}', space=sflag, size = 0x4, scoped, tag = 'scoped memory for tpu_custom_call.1']
    #allocation10 [shape = 'u8[512]{0}', space=vmem, size = 0x400, scoped, tag = 'input window, operand 4, single buffered']
    #allocation11 [shape = 'u8[16384]{0}', space=vmem, size = 0x4000, scoped, tag = 'output window, operand 0']
    %10 = vsyncpa [#allocation3], 0
    %s11 = scalar_lea.sflag [#allocation3], 1
    %12 = vsyncpa %s11, 0
    %13 = vsyncpa [#allocation6], 0
    %s14 = scalar_lea.sflag [#allocation6], 1
    %15 = vsyncpa %s14, 0
    %16 = vsyncpa [#allocation9], 0
    %17 = vsyncpa [#allocation4], 0
    %s18 = scalar_lea.sflag [#allocation4], 1
    %19 = vsyncpa %s18, 0
    loop: start=0, step=1, limit=4
    $region2: #{tpu_custom_call.1} parent=1 // loop_pre_header
      _
    $region3: #{tpu_custom_call.1} parent=1 // loop_header
      %s21 = sphi 0, %s25
      %p22 = scmp.ge.s32.totalorder %s21, 4
      %s31 = sphi 0, %s33
      %s34 = sphi 0, %s31
      %s35 = sphi 0, %s34
      %s51 = sphi 0, %s35
      %s57 = sphi 0, %s59
      %s60 = sphi 0, %s57
      %s61 = sphi 0, %s60
      %s77 = sphi 0, %s61
      %s81 = sphi 0, %s81
      %s83 = sphi 0, %s81
      %s84 = sphi 0, %s83
      %s98 = sphi 0, %s84
      %s102 = sphi 0, %s102
      %s104 = sphi 0, %s102
      %s105 = sphi 0, %s104
      %s119 = sphi 0, %s105
      %s123 = sphi 0, %s123
      %s125 = sphi 0, %s123
      %s126 = sphi 0, %s125
      %s140 = sphi 0, %s126
      %s146 = sphi 0, %s148
      %s149 = sphi 0, %s146
      %s150 = sphi 0, %s149
      %s166 = sphi 0, %s150
    $region4: #{tpu_custom_call.1} parent=1 // loop_header_branch
      %24 = sbr.rel (%p22) target = $region8
    $region5: #{tpu_custom_call.1} parent=1 // loop_body
      %s26 = ssub.s32 %s21, 1
      %s27 = ssub.s32 %s21, 2
      %s28 = sadd.s32 %s21, 1
      %s29 = ssub.s32 %s21, %s28
      %p30 = scmp.eq.s32.totalorder %s29, 0
      %s32 = sadd.s32 %s31, 1
      %s33 = scalar_select %p30, %s31, %s32
      %p36 = pneg %p30
      %p37 = scmp.eq.s32.totalorder %s21, 1
      %p38 = por %p36, %p37
      %p39 = scmp.ne.s32.totalorder %s31, %s34
      %p40 = scmp.eq.s32.totalorder %s21, 0
      %p41 = por %p39, %p40
      %p42 = scmp.ne.s32.totalorder %s31, %s34
      %p43 = scmp.eq.s32.totalorder %s26, 1
      %p44 = por %p42, %p43
      %p45 = scmp.ne.s32.totalorder %s34, %s35
      %p46 = scmp.eq.s32.totalorder %s26, 0
      %p47 = por %p45, %p46
      %p48 = scmp.ne.s32.totalorder %s34, %s35
      %p49 = scmp.eq.s32.totalorder %s27, 1
      %p50 = por %p48, %p49
      %p52 = scmp.ne.s32.totalorder %s35, %s51
      %p53 = scmp.eq.s32.totalorder %s27, 0
      %p54 = por %p52, %p53
      %s55 = ssub.s32 %s21, %s28
      %p56 = scmp.eq.s32.totalorder %s55, 0
      %s58 = sadd.s32 %s57, 1
      %s59 = scalar_select %p56, %s57, %s58
      %p62 = pneg %p56
      %p63 = scmp.eq.s32.totalorder %s21, 1
      %p64 = por %p62, %p63
      %p65 = scmp.ne.s32.totalorder %s57, %s60
      %p66 = scmp.eq.s32.totalorder %s21, 0
      %p67 = por %p65, %p66
      %p68 = scmp.ne.s32.totalorder %s57, %s60
      %p69 = scmp.eq.s32.totalorder %s26, 1
      %p70 = por %p68, %p69
      %p71 = scmp.ne.s32.totalorder %s60, %s61
      %p72 = scmp.eq.s32.totalorder %s26, 0
      %p73 = por %p71, %p72
      %p74 = scmp.ne.s32.totalorder %s60, %s61
      %p75 = scmp.eq.s32.totalorder %s27, 1
      %p76 = por %p74, %p75
      %p78 = scmp.ne.s32.totalorder %s61, %s77
      %p79 = scmp.eq.s32.totalorder %s27, 0
      %p80 = por %p78, %p79
      %s82 = sadd.s32 %s81, 1
      %p85 = scmp.eq.s32.totalorder %s21, 1
      %p86 = scmp.ne.s32.totalorder %s81, %s83
      %p87 = scmp.eq.s32.totalorder %s21, 0
      %p88 = por %p86, %p87
      %p89 = scmp.ne.s32.totalorder %s81, %s83
      %p90 = scmp.eq.s32.totalorder %s26, 1
      %p91 = por %p89, %p90
      %p92 = scmp.ne.s32.totalorder %s83, %s84
      %p93 = scmp.eq.s32.totalorder %s26, 0
      %p94 = por %p92, %p93
      %p95 = scmp.ne.s32.totalorder %s83, %s84
      %p96 = scmp.eq.s32.totalorder %s27, 1
      %p97 = por %p95, %p96
      %p99 = scmp.ne.s32.totalorder %s84, %s98
      %p100 = scmp.eq.s32.totalorder %s27, 0
      %p101 = por %p99, %p100
      %s103 = sadd.s32 %s102, 1
      %p106 = scmp.eq.s32.totalorder %s21, 1
      %p107 = scmp.ne.s32.totalorder %s102, %s104
      %p108 = scmp.eq.s32.totalorder %s21, 0
      %p109 = por %p107, %p108
      %p110 = scmp.ne.s32.totalorder %s102, %s104
      %p111 = scmp.eq.s32.totalorder %s26, 1
      %p112 = por %p110, %p111
      %p113 = scmp.ne.s32.totalorder %s104, %s105
      %p114 = scmp.eq.s32.totalorder %s26, 0
      %p115 = por %p113, %p114
      %p116 = scmp.ne.s32.totalorder %s104, %s105
      %p117 = scmp.eq.s32.totalorder %s27, 1
      %p118 = por %p116, %p117
      %p120 = scmp.ne.s32.totalorder %s105, %s119
      %p121 = scmp.eq.s32.totalorder %s27, 0
      %p122 = por %p120, %p121
      %s124 = sadd.s32 %s123, 1
      %p127 = scmp.eq.s32.totalorder %s21, 1
      %p128 = scmp.ne.s32.totalorder %s123, %s125
      %p129 = scmp.eq.s32.totalorder %s21, 0
      %p130 = por %p128, %p129
      %p131 = scmp.ne.s32.totalorder %s123, %s125
      %p132 = scmp.eq.s32.totalorder %s26, 1
      %p133 = por %p131, %p132
      %p134 = scmp.ne.s32.totalorder %s125, %s126
      %p135 = scmp.eq.s32.totalorder %s26, 0
      %p136 = por %p134, %p135
      %p137 = scmp.ne.s32.totalorder %s125, %s126
      %p138 = scmp.eq.s32.totalorder %s27, 1
      %p139 = por %p137, %p138
      %p141 = scmp.ne.s32.totalorder %s126, %s140
      %p142 = scmp.eq.s32.totalorder %s27, 0
      %p143 = por %p141, %p142
      %s144 = ssub.s32 %s21, %s28
      %p145 = scmp.eq.s32.totalorder %s144, 0
      %s147 = sadd.s32 %s146, 1
      %s148 = scalar_select %p145, %s146, %s147
      %p151 = pneg %p145
      %p152 = scmp.eq.s32.totalorder %s21, 1
      %p153 = por %p151, %p152
      %p154 = scmp.ne.s32.totalorder %s146, %s149
      %p155 = scmp.eq.s32.totalorder %s21, 0
      %p156 = por %p154, %p155
      %p157 = scmp.ne.s32.totalorder %s146, %s149
      %p158 = scmp.eq.s32.totalorder %s26, 1
      %p159 = por %p157, %p158
      %p160 = scmp.ne.s32.totalorder %s149, %s150
      %p161 = scmp.eq.s32.totalorder %s26, 0
      %p162 = por %p160, %p161
      %p163 = scmp.ne.s32.totalorder %s149, %s150
      %p164 = scmp.eq.s32.totalorder %s27, 1
      %p165 = por %p163, %p164
      %p167 = scmp.ne.s32.totalorder %s150, %s166
      %p168 = scmp.eq.s32.totalorder %s27, 0
      %p169 = por %p167, %p168
      %p170 = scmp.le.s32.totalorder 1, %s21
      %p171 = scmp.lt.s32.totalorder %s21, 3
      %p172 = pnand %p170, %p171
      %p173 = pneg %p172
      // Predicated region
      $region9: #{tpu_custom_call.1} parent=5 // pred_check
        _
      $region10: #{tpu_custom_call.1} parent=5 // pred_check_branch
        %175 = sbr.rel (%p172) target = $region12
      $region11: #{tpu_custom_call.1} parent=5 // pred_region
        %s176 = ssub.s32 %s21, 1
        // Predicated region
        $region13: #{tpu_custom_call.1} parent=11 // pred_check
          %p177 = pneg %p94
        $region14: #{tpu_custom_call.1} parent=11 // pred_check_branch
          %179 = sbr.rel (%p177) target = $region16
        $region15: #{tpu_custom_call.1} parent=11 // pred_region
          %s181 = ssub.s32 256, 256
          %182 = vsyncadd [#allocation6], %s181
          %s183 = sshll.u32 [#allocation7], 4
          %s184 = int_to_ptr.vmem [resolvable:$true] %s183
          %189 = dma.hbm_to_vmem [thread:$0]  %s2, 256, %s184, [#allocation6], 64, 64, 4
        $region16: #{tpu_custom_call.1} parent=11 // pred_fallthru
          _
        // Predicated region
        $region17: #{tpu_custom_call.1} parent=11 // pred_check
          %p190 = pneg %p115
        $region18: #{tpu_custom_call.1} parent=11 // pred_check_branch
          %192 = sbr.rel (%p190) target = $region20
        $region19: #{tpu_custom_call.1} parent=11 // pred_region
          %s194 = ssub.s32 1024, 1024
          %195 = vsyncadd [#allocation9], %s194
          %s196 = sshll.u32 [#allocation8], 4
          %s197 = int_to_ptr.vmem [resolvable:$true] %s196
          %202 = dma.hbm_to_vmem [thread:$0]  %s3, 1024, %s197, [#allocation9], 64, 64, 4
        $region20: #{tpu_custom_call.1} parent=11 // pred_fallthru
          _
        // Predicated region
        $region21: #{tpu_custom_call.1} parent=11 // pred_check
          %p203 = pneg %p136
        $region22: #{tpu_custom_call.1} parent=11 // pred_check_branch
          %205 = sbr.rel (%p203) target = $region24
        $region23: #{tpu_custom_call.1} parent=11 // pred_region
          %s207 = ssub.s32 16, 16
          %208 = vsyncadd [#allocation9], %s207
          %s210 = sshll.u32 [#allocation10], 4
          %s211 = int_to_ptr.vmem [resolvable:$true] %s210
          %213 = dma.hbm_to_vmem [thread:$0]  %s4, 16, %s211, [#allocation9]
        $region24: #{tpu_custom_call.1} parent=11 // pred_fallthru
          _
      $region12: #{tpu_custom_call.1} parent=5 // pred_fallthru
        _
      %p214 = scmp.lt.s32.totalorder %s21, 2
      // Predicated region
      $region25: #{tpu_custom_call.1} parent=5 // pred_check
        %p215 = pneg %p214
      $region26: #{tpu_custom_call.1} parent=5 // pred_check_branch
        %217 = sbr.rel (%p215) target = $region28
      $region27: #{tpu_custom_call.1} parent=5 // pred_region
        // Predicated region
        $region29: #{tpu_custom_call.1} parent=27 // pred_check
          %p218 = pneg %p41
        $region30: #{tpu_custom_call.1} parent=27 // pred_check_branch
          %220 = sbr.rel (%p218) target = $region32
        $region31: #{tpu_custom_call.1} parent=27 // pred_region
          %s221 = sand.u32 %s31, 1
          %s222 = scalar_lea.sflag [#allocation3], %s221
          %s223 = sand.u32 %s31, 1
          %s224 = smul.addr %s223, 16
          %s225 = scalar_lea.vmem [#allocation2], %s224
          %s227 = ssub.s32 256, 256
          %228 = vsyncadd %s222, %s227
          %s229 = smul.addr %s21, 2
          %s230 = smul.addr %s229, 128
          %s231 = scalar_lea.hbm %s0, %s230
          %s232 = sshll.u32 %s225, 4
          %s233 = int_to_ptr.vmem [resolvable:$true] %s232
          %238 = dma.hbm_to_vmem [thread:$0]  %s231, 256, %s233, %s222, 128, 128, 8
        $region32: #{tpu_custom_call.1} parent=27 // pred_fallthru
          _
        // Predicated region
        $region33: #{tpu_custom_call.1} parent=27 // pred_check
          %p239 = pneg %p67
        $region34: #{tpu_custom_call.1} parent=27 // pred_check_branch
          %241 = sbr.rel (%p239) target = $region36
        $region35: #{tpu_custom_call.1} parent=27 // pred_region
          %s242 = sand.u32 %s21, 1
          %s243 = scalar_lea.sflag [#allocation6], %s242
          %s244 = sand.u32 %s57, 1
          %s245 = smul.addr %s244, 4
          %s246 = scalar_lea.vmem [#allocation5], %s245
          %s248 = ssub.s32 64, 64
          %249 = vsyncadd %s243, %s248
          %s250 = smul.addr %s21, 64
          %s251 = scalar_lea.hbm %s1, %s250
          %s253 = sshll.u32 %s246, 4
          %s254 = int_to_ptr.vmem [resolvable:$true] %s253
          %256 = dma.hbm_to_vmem [thread:$0]  %s251, 64, %s254, %s243
        $region36: #{tpu_custom_call.1} parent=27 // pred_fallthru
          _
      $region28: #{tpu_custom_call.1} parent=5 // pred_fallthru
        _
      %p257 = scmp.le.s32.totalorder 1, %s21
      %p258 = scmp.lt.s32.totalorder %s21, 3
      %p259 = pnand %p257, %p258
      %p260 = pneg %p259
      // Predicated region
      $region37: #{tpu_custom_call.1} parent=5 // pred_check
        _
      $region38: #{tpu_custom_call.1} parent=5 // pred_check_branch
        %262 = sbr.rel (%p259) target = $region40
      $region39: #{tpu_custom_call.1} parent=5 // pred_region
        %s263 = ssub.s32 %s21, 1
        %s264 = sand.u32 %s34, 1
        %s265 = scalar_lea.sflag [#allocation3], %s264
        %s266 = sand.u32 %s34, 1
        %s267 = smul.addr %s266, 16
        %s268 = scalar_lea.vmem [#allocation2], %s267
        // Predicated region
        $region41: #{tpu_custom_call.1} parent=39 // pred_check
          %p269 = pneg %p47
        $region42: #{tpu_custom_call.1} parent=39 // pred_check_branch
          %271 = sbr.rel (%p269) target = $region44
        $region43: #{tpu_custom_call.1} parent=39 // pred_region
          %272 = dma.done %s265, 256
        $region44: #{tpu_custom_call.1} parent=39 // pred_fallthru
          _
        %s273 = sand.u32 %s26, 1
        %s274 = scalar_lea.sflag [#allocation6], %s273
        %s275 = sand.u32 %s60, 1
        %s276 = smul.addr %s275, 4
        %s277 = scalar_lea.vmem [#allocation5], %s276
        // Predicated region
        $region45: #{tpu_custom_call.1} parent=39 // pred_check
          %p278 = pneg %p73
        $region46: #{tpu_custom_call.1} parent=39 // pred_check_branch
          %280 = sbr.rel (%p278) target = $region48
        $region47: #{tpu_custom_call.1} parent=39 // pred_region
          %281 = dma.done %s274, 64
        $region48: #{tpu_custom_call.1} parent=39 // pred_fallthru
          _
        // Predicated region
        $region49: #{tpu_custom_call.1} parent=39 // pred_check
          %p282 = pneg %p94
        $region50: #{tpu_custom_call.1} parent=39 // pred_check_branch
          %284 = sbr.rel (%p282) target = $region52
        $region51: #{tpu_custom_call.1} parent=39 // pred_region
          %285 = dma.done [#allocation6], 256
        $region52: #{tpu_custom_call.1} parent=39 // pred_fallthru
          _
        // Predicated region
        $region53: #{tpu_custom_call.1} parent=39 // pred_check
          %p286 = pneg %p115
        $region54: #{tpu_custom_call.1} parent=39 // pred_check_branch
          %288 = sbr.rel (%p286) target = $region56
        $region55: #{tpu_custom_call.1} parent=39 // pred_region
          %289 = dma.done [#allocation9], 1024
        $region56: #{tpu_custom_call.1} parent=39 // pred_fallthru
          _
        // Predicated region
        $region57: #{tpu_custom_call.1} parent=39 // pred_check
          %p290 = pneg %p136
        $region58: #{tpu_custom_call.1} parent=39 // pred_check_branch
          %292 = sbr.rel (%p290) target = $region60
        $region59: #{tpu_custom_call.1} parent=39 // pred_region
          %293 = dma.done [#allocation9], 16
        $region60: #{tpu_custom_call.1} parent=39 // pred_fallthru
          _
        %s294 = sand.u32 %s34, 1
        %s295 = scalar_lea.sflag [#allocation3], %s294
        %s296 = sand.u32 %s34, 1
        %s297 = smul.addr %s296, 16
        %s298 = scalar_lea.vmem [#allocation2], %s297
        %p299 = pneg %p47
        %p300 = pneg %p44
        %s301 = sand.u32 %s26, 1
        %s302 = scalar_lea.sflag [#allocation6], %s301
        %s303 = sand.u32 %s60, 1
        %s304 = smul.addr %s303, 4
        %s305 = scalar_lea.vmem [#allocation5], %s304
        %p306 = pneg %p73
        %p307 = pneg %p70
        %p308 = pneg %p94
        %p309 = pneg %p91
        %p310 = pneg %p115
        %p311 = pneg %p112
        %p312 = pneg %p136
        %p313 = pneg %p133
        %p314 = pneg %p162
        %p315 = pneg %p159
        %s316 = sand.u32 %s149, 1
        %s317 = scalar_lea.sflag [#allocation4], %s316
        %s318 = sand.u32 %s149, 1
        %s319 = smul.addr %s318, 16
        %s320 = scalar_lea.vmem [#allocation11], %s319
        %v322 = vld [vmem:[%s268] sm:$0xff]
        %v323 = vld [vmem:[%s268 + $0x8] sm:$0xff]
        %v324 = vld [vmem:[%s277] sm:$0xf]
        %v325 = vld [vmem:[#allocation7] sm:$0xf]
        %v326 = vld [vmem:[#allocation7 + $0x4] sm:$0xf]
        %v327 = vld [vmem:[#allocation7 + $0x8] sm:$0xf]
        %v328 = vld [vmem:[#allocation7 + $0xc] sm:$0xf]
        %v329 = vld [vmem:[#allocation8] sm:$0xf]
        %v330 = vld [vmem:[#allocation8 + $0x4] sm:$0xf]
        %v331 = vld [vmem:[#allocation8 + $0x8] sm:$0xf]
        %v332 = vld [vmem:[#allocation8 + $0xc] sm:$0xf]
        %v333 = vld [vmem:[#allocation8 + $0x10] sm:$0xf]
        %v334 = vld [vmem:[#allocation8 + $0x14] sm:$0xf]
        %v335 = vld [vmem:[#allocation8 + $0x18] sm:$0xf]
        %v336 = vld [vmem:[#allocation8 + $0x1c] sm:$0xf]
        %v337 = vld [vmem:[#allocation8 + $0x20] sm:$0xf]
        %v338 = vld [vmem:[#allocation8 + $0x24] sm:$0xf]
        %v339 = vld [vmem:[#allocation8 + $0x28] sm:$0xf]
        %v340 = vld [vmem:[#allocation8 + $0x2c] sm:$0xf]
        %v341 = vld [vmem:[#allocation8 + $0x30] sm:$0xf]
        %v342 = vld [vmem:[#allocation8 + $0x34] sm:$0xf]
        %v343 = vld [vmem:[#allocation8 + $0x38] sm:$0xf]
        %v344 = vld [vmem:[#allocation8 + $0x3c] sm:$0xf]
        %v345 = vld [vmem:[#allocation10] sm:$0x1]
        %v350 = vunpack.c.l.b16 %v325
        %v351 = vunpack.c.l.b16 %v326
        %v352 = vunpack.c.l.b16 %v327
        %v353 = vunpack.c.l.b16 %v328
        %v354 = vpack.c.b16 %v351, %v350
        %v355 = vpack.c.b16 %v353, %v352
        %vm358 = vcmask 261120
        %v360 = vsel %vm358, %v324, 0
        %362 = vmatprep.subr.bf16.mxu0 0
        %363 = vmatpush1.bf16.msra.mxu0 %v354
        %364 = vmatprep.subr.bf16.mxu0 0
        %365 = vmatpush1.bf16.msra.mxu0 %v355
        %366 = vmatprep.subr.bf16.mxu0 0
        %367 = vmatpush1.bf16.msra.mxu0 0
        %368 = vmatprep.subr.bf16.mxu0 0
        %369 = vmatpush1.bf16.msra.mxu0 0
        %370 = vmatprep.subr.bf16.mxu0 0
        %371 = vmatpush1.bf16.msra.mxu0 0
        %372 = vmatprep.subr.bf16.mxu0 0
        %373 = vmatpush1.bf16.msra.mxu0 0
        %374 = vmatprep.subr.bf16.mxu0 0
        %375 = vmatpush1.bf16.msra.mxu0 0
        %376 = vmatprep.subr.bf16.mxu0 0
        %377 = vmatpush1.bf16.msra.mxu0 0
        %378 = vmatprep.subr.bf16.mxu0 0
        %379 = vmatpush1.bf16.msra.mxu0 0
        %380 = vmatprep.subr.bf16.mxu0 0
        %381 = vmatpush1.bf16.msra.mxu0 0
        %382 = vmatprep.subr.bf16.mxu0 0
        %383 = vmatpush1.bf16.msra.mxu0 0
        %384 = vmatprep.subr.bf16.mxu0 0
        %385 = vmatpush1.bf16.msra.mxu0 0
        %386 = vmatprep.subr.bf16.mxu0 0
        %387 = vmatpush1.bf16.msra.mxu0 0
        %388 = vmatprep.subr.bf16.mxu0 0
        %389 = vmatpush1.bf16.msra.mxu0 0
        %390 = vmatprep.subr.bf16.mxu0 0
        %391 = vmatpush1.bf16.msra.mxu0 0
        %392 = vmatprep.subr.bf16.mxu0 0
        %393 = vmatpush1.bf16.msra.mxu0 0
        %394 = vmatprep.mubr.bf16.mxu0 0
        %395 = vmatmul.mubr.bf16.gmra.mrb[0].mxu0 %v360
        %v396 = vpop.f32.mrb[0].mxu0
        %v397 = vadd.f32 0.0, %v396
        %v398 = vpop.f32.mrb[0].mxu0
        %v399 = vpop.f32.mrb[0].mxu0
        %v400 = vpop.f32.mrb[0].mxu0
        %401 = vdwg.mxu0
        %v403 = vcombine.high %v397, %v397
        %v405 = vunpack.c.l.s4 1966171168
        %v406 = vunpack.c.0.s8 %v405
        %v407 = vlaneseq
        %v408 = vshrl.u32 %v407, 7
        %v409 = vsub.s32 %v406, %v408
        %v410 = vrot.slane %v397, %v409
        %v412 = vunpack.c.l.s4 1966171168
        %v413 = vunpack.c.0.s8 %v412
        %v414 = vlaneseq
        %v415 = vshrl.u32 %v414, 7
        %v416 = vsub.s32 %v413, %v415
        %v417 = vrot.slane %v403, %v416
        %v418 = vcombine.high %v410, %v410
        %v419 = vcombine.high %v417, %v417
        %v421 = vunpack.c.l.s4 1966171168
        %v422 = vunpack.c.0.s8 %v421
        %v423 = vlaneseq
        %v424 = vshrl.u32 %v423, 7
        %v425 = vsub.s32 %v422, %v424
        %v426 = vrot.slane %v410, %v425
        %v428 = vunpack.c.l.s4 1966171168
        %v429 = vunpack.c.0.s8 %v428
        %v430 = vlaneseq
        %v431 = vshrl.u32 %v430, 7
        %v432 = vsub.s32 %v429, %v431
        %v433 = vrot.slane %v417, %v432
        %v435 = vunpack.c.l.s4 1966171168
        %v436 = vunpack.c.0.s8 %v435
        %v437 = vlaneseq
        %v438 = vshrl.u32 %v437, 7
        %v439 = vsub.s32 %v436, %v438
        %v440 = vrot.slane %v418, %v439
        %v442 = vunpack.c.l.s4 1966171168
        %v443 = vunpack.c.0.s8 %v442
        %v444 = vlaneseq
        %v445 = vshrl.u32 %v444, 7
        %v446 = vsub.s32 %v443, %v445
        %v447 = vrot.slane %v419, %v446
        %v448 = vcombine.high %v426, %v426
        %v449 = vcombine.high %v433, %v433
        %v450 = vcombine.high %v440, %v440
        %v451 = vcombine.high %v447, %v447
        %v452 = vlaneseq
        %v453 = vshrl.u32 %v452, 7
        %v454 = vsub.s32 0, %v453
        %v455 = vrot.slane %v426, %v454
        %v456 = vlaneseq
        %v457 = vshrl.u32 %v456, 7
        %v458 = vsub.s32 0, %v457
        %v459 = vrot.slane %v440, %v458
        %v460 = vlaneseq
        %v461 = vshrl.u32 %v460, 7
        %v462 = vsub.s32 0, %v461
        %v463 = vrot.slane %v448, %v462
        %v464 = vlaneseq
        %v465 = vshrl.u32 %v464, 7
        %v466 = vsub.s32 0, %v465
        %v467 = vrot.slane %v450, %v466
        %v468 = vlaneseq
        %v469 = vshrl.u32 %v468, 7
        %v470 = vsub.s32 0, %v469
        %v471 = vrot.slane %v433, %v470
        %v472 = vlaneseq
        %v473 = vshrl.u32 %v472, 7
        %v474 = vsub.s32 0, %v473
        %v475 = vrot.slane %v447, %v474
        %v476 = vlaneseq
        %v477 = vshrl.u32 %v476, 7
        %v478 = vsub.s32 0, %v477
        %v479 = vrot.slane %v449, %v478
        %v480 = vlaneseq
        %v481 = vshrl.u32 %v480, 7
        %v482 = vsub.s32 0, %v481
        %v483 = vrot.slane %v451, %v482
        %v492 = vmul.f32 %v455, %v322
        %v493 = vmul.f32 %v455, %v323
        %v494 = vmul.f32 %v459, %v322
        %v495 = vmul.f32 %v459, %v323
        %v496 = vmul.f32 %v463, %v322
        %v497 = vmul.f32 %v463, %v323
        %v498 = vmul.f32 %v467, %v322
        %v499 = vmul.f32 %v467, %v323
        %v500 = vmul.f32 %v471, %v322
        %v501 = vmul.f32 %v471, %v323
        %v502 = vmul.f32 %v475, %v322
        %v503 = vmul.f32 %v475, %v323
        %v504 = vmul.f32 %v479, %v322
        %v505 = vmul.f32 %v479, %v323
        %v506 = vmul.f32 %v483, %v322
        %v507 = vmul.f32 %v483, %v323
        %v508 = vtanh.pop %v492
        %v509 = vtanh.pop %v493
        %v510 = vtanh.pop %v494
        %v511 = vtanh.pop %v495
        %v512 = vtanh.pop %v496
        %v513 = vtanh.pop %v497
        %v514 = vtanh.pop %v498
        %v515 = vtanh.pop %v499
        %v516 = vtanh.pop %v500
        %v517 = vtanh.pop %v501
        %v518 = vtanh.pop %v502
        %v519 = vtanh.pop %v503
        %v520 = vtanh.pop %v504
        %v521 = vtanh.pop %v505
        %v522 = vtanh.pop %v506
        %v523 = vtanh.pop %v507
        %v524 = vpack.c.bf16 %v509, %v508
        %v525 = vpack.c.bf16 %v511, %v510
        %v526 = vpack.c.bf16 %v513, %v512
        %v527 = vpack.c.bf16 %v515, %v514
        %v528 = vpack.c.bf16 %v517, %v516
        %v529 = vpack.c.bf16 %v519, %v518
        %v530 = vpack.c.bf16 %v521, %v520
        %v531 = vpack.c.bf16 %v523, %v522
        %v548 = vunpack.c.l.b16 %v329
        %v549 = vunpack.c.l.b16 %v330
        %v550 = vunpack.c.l.b16 %v331
        %v551 = vunpack.c.l.b16 %v332
        %v552 = vunpack.c.l.b16 %v333
        %v553 = vunpack.c.l.b16 %v334
        %v554 = vunpack.c.l.b16 %v335
        %v555 = vunpack.c.l.b16 %v336
        %v556 = vunpack.c.l.b16 %v337
        %v557 = vunpack.c.l.b16 %v338
        %v558 = vunpack.c.l.b16 %v339
        %v559 = vunpack.c.l.b16 %v340
        %v560 = vunpack.c.l.b16 %v341
        %v561 = vunpack.c.l.b16 %v342
        %v562 = vunpack.c.l.b16 %v343
        %v563 = vunpack.c.l.b16 %v344
        %v564 = vpack.c.b16 %v549, %v548
        %v565 = vpack.c.b16 %v551, %v550
        %v566 = vpack.c.b16 %v553, %v552
        %v567 = vpack.c.b16 %v555, %v554
        %v568 = vpack.c.b16 %v557, %v556
        %v569 = vpack.c.b16 %v559, %v558
        %v570 = vpack.c.b16 %v561, %v560
        %v571 = vpack.c.b16 %v563, %v562
        %580 = vmatprep.subr.bf16.mxu0 0
        %581 = vmatpush1.bf16.msra.mxu0 %v564
        %582 = vmatprep.subr.bf16.mxu0 0
        %583 = vmatpush1.bf16.msra.mxu0 %v565
        %584 = vmatprep.subr.bf16.mxu0 0
        %585 = vmatpush1.bf16.msra.mxu0 %v566
        %586 = vmatprep.subr.bf16.mxu0 0
        %587 = vmatpush1.bf16.msra.mxu0 %v567
        %588 = vmatprep.subr.bf16.mxu0 0
        %589 = vmatpush1.bf16.msra.mxu0 %v568
        %590 = vmatprep.subr.bf16.mxu0 0
        %591 = vmatpush1.bf16.msra.mxu0 %v569
        %592 = vmatprep.subr.bf16.mxu0 0
        %593 = vmatpush1.bf16.msra.mxu0 %v570
        %594 = vmatprep.subr.bf16.mxu0 0
        %595 = vmatpush1.bf16.msra.mxu0 %v571
        %596 = vmatprep.subr.bf16.mxu0 0
        %597 = vmatpush1.bf16.msra.mxu0 0
        %598 = vmatprep.subr.bf16.mxu0 0
        %599 = vmatpush1.bf16.msra.mxu0 0
        %600 = vmatprep.subr.bf16.mxu0 0
        %601 = vmatpush1.bf16.msra.mxu0 0
        %602 = vmatprep.subr.bf16.mxu0 0
        %603 = vmatpush1.bf16.msra.mxu0 0
        %604 = vmatprep.subr.bf16.mxu0 0
        %605 = vmatpush1.bf16.msra.mxu0 0
        %606 = vmatprep.subr.bf16.mxu0 0
        %607 = vmatpush1.bf16.msra.mxu0 0
        %608 = vmatprep.subr.bf16.mxu0 0
        %609 = vmatpush1.bf16.msra.mxu0 0
        %610 = vmatprep.subr.bf16.mxu0 0
        %611 = vmatpush1.bf16.msra.mxu0 0
        %612 = vmatprep.mubr.bf16.mxu0 0
        %613 = vmatmul.mubr.bf16.gmra.mrb[0].mxu0 %v524
        %v614 = vpop.f32.mrb[0].mxu0
        %v615 = vadd.f32 0.0, %v614
        %v616 = vpop.f32.mrb[0].mxu0
        %v617 = vpop.f32.mrb[0].mxu0
        %v618 = vadd.f32 0.0, %v617
        %v619 = vpop.f32.mrb[0].mxu0
        %620 = vmatprep.mubr.bf16.mxu0 0
        %621 = vmatmul.mubr.bf16.gmra.mrb[0].mxu0 %v525
        %v622 = vpop.f32.mrb[0].mxu0
        %v623 = vadd.f32 0.0, %v622
        %v624 = vpop.f32.mrb[0].mxu0
        %v625 = vpop.f32.mrb[0].mxu0
        %v626 = vadd.f32 0.0, %v625
        %v627 = vpop.f32.mrb[0].mxu0
        %628 = vmatprep.mubr.bf16.mxu0 0
        %629 = vmatmul.mubr.bf16.gmra.mrb[0].mxu0 %v526
        %v630 = vpop.f32.mrb[0].mxu0
        %v631 = vadd.f32 0.0, %v630
        %v632 = vpop.f32.mrb[0].mxu0
        %v633 = vpop.f32.mrb[0].mxu0
        %v634 = vadd.f32 0.0, %v633
        %v635 = vpop.f32.mrb[0].mxu0
        %636 = vmatprep.mubr.bf16.mxu0 0
        %637 = vmatmul.mubr.bf16.gmra.mrb[0].mxu0 %v527
        %v638 = vpop.f32.mrb[0].mxu0
        %v639 = vadd.f32 0.0, %v638
        %v640 = vpop.f32.mrb[0].mxu0
        %v641 = vpop.f32.mrb[0].mxu0
        %v642 = vadd.f32 0.0, %v641
        %v643 = vpop.f32.mrb[0].mxu0
        %644 = vmatprep.mubr.bf16.mxu0 0
        %645 = vmatmul.mubr.bf16.gmra.mrb[0].mxu0 %v528
        %v646 = vpop.f32.mrb[0].mxu0
        %v647 = vadd.f32 0.0, %v646
        %v648 = vpop.f32.mrb[0].mxu0
        %v649 = vpop.f32.mrb[0].mxu0
        %v650 = vadd.f32 0.0, %v649
        %v651 = vpop.f32.mrb[0].mxu0
        %652 = vmatprep.mubr.bf16.mxu0 0
        %653 = vmatmul.mubr.bf16.gmra.mrb[0].mxu0 %v529
        %v654 = vpop.f32.mrb[0].mxu0
        %v655 = vadd.f32 0.0, %v654
        %v656 = vpop.f32.mrb[0].mxu0
        %v657 = vpop.f32.mrb[0].mxu0
        %v658 = vadd.f32 0.0, %v657
        %v659 = vpop.f32.mrb[0].mxu0
        %660 = vmatprep.mubr.bf16.mxu0 0
        %661 = vmatmul.mubr.bf16.gmra.mrb[0].mxu0 %v530
        %v662 = vpop.f32.mrb[0].mxu0
        %v663 = vadd.f32 0.0, %v662
        %v664 = vpop.f32.mrb[0].mxu0
        %v665 = vpop.f32.mrb[0].mxu0
        %v666 = vadd.f32 0.0, %v665
        %v667 = vpop.f32.mrb[0].mxu0
        %668 = vmatprep.mubr.bf16.mxu0 0
        %669 = vmatmul.mubr.bf16.gmra.mrb[0].mxu0 %v531
        %v670 = vpop.f32.mrb[0].mxu0
        %v671 = vadd.f32 0.0, %v670
        %v672 = vpop.f32.mrb[0].mxu0
        %v673 = vpop.f32.mrb[0].mxu0
        %v674 = vadd.f32 0.0, %v673
        %v675 = vpop.f32.mrb[0].mxu0
        %676 = vdwg.mxu0
        %v678 = vlaneseq
        %v679 = vshrl.u32 %v678, 7
        %v680 = vsub.s32 0, %v679
        %v681 = vrot.slane %v345, %v680
        %v683 = vadd.f32 %v615, %v681
        %v684 = vadd.f32 %v618, %v681
        %v685 = vadd.f32 %v623, %v681
        %v686 = vadd.f32 %v626, %v681
        %v687 = vadd.f32 %v631, %v681
        %v688 = vadd.f32 %v634, %v681
        %v689 = vadd.f32 %v639, %v681
        %v690 = vadd.f32 %v642, %v681
        %v691 = vadd.f32 %v647, %v681
        %v692 = vadd.f32 %v650, %v681
        %v693 = vadd.f32 %v655, %v681
        %v694 = vadd.f32 %v658, %v681
        %v695 = vadd.f32 %v663, %v681
        %v696 = vadd.f32 %v666, %v681
        %v697 = vadd.f32 %v671, %v681
        %v698 = vadd.f32 %v674, %v681
        %v699 = vmax.f32 %v683, %v684
        %v700 = vrot.slane %v699, 4
        %v701 = vmax.f32 %v699, %v700
        %v702 = vrot.slane %v701, 2
        %v703 = vmax.f32 %v701, %v702
        %v704 = vrot.slane %v703, 1
        %v705 = vmax.f32 %v703, %v704
        %v706 = vmax.f32 %v685, %v686
        %v707 = vrot.slane %v706, 4
        %v708 = vmax.f32 %v706, %v707
        %v709 = vrot.slane %v708, 2
        %v710 = vmax.f32 %v708, %v709
        %v711 = vrot.slane %v710, 1
        %v712 = vmax.f32 %v710, %v711
        %v713 = vmax.f32 %v687, %v688
        %v714 = vrot.slane %v713, 4
        %v715 = vmax.f32 %v713, %v714
        %v716 = vrot.slane %v715, 2
        %v717 = vmax.f32 %v715, %v716
        %v718 = vrot.slane %v717, 1
        %v719 = vmax.f32 %v717, %v718
        %v720 = vmax.f32 %v689, %v690
        %v721 = vrot.slane %v720, 4
        %v722 = vmax.f32 %v720, %v721
        %v723 = vrot.slane %v722, 2
        %v724 = vmax.f32 %v722, %v723
        %v725 = vrot.slane %v724, 1
        %v726 = vmax.f32 %v724, %v725
        %v727 = vmax.f32 %v691, %v692
        %v728 = vrot.slane %v727, 4
        %v729 = vmax.f32 %v727, %v728
        %v730 = vrot.slane %v729, 2
        %v731 = vmax.f32 %v729, %v730
        %v732 = vrot.slane %v731, 1
        %v733 = vmax.f32 %v731, %v732
        %v734 = vmax.f32 %v693, %v694
        %v735 = vrot.slane %v734, 4
        %v736 = vmax.f32 %v734, %v735
        %v737 = vrot.slane %v736, 2
        %v738 = vmax.f32 %v736, %v737
        %v739 = vrot.slane %v738, 1
        %v740 = vmax.f32 %v738, %v739
        %v741 = vmax.f32 %v695, %v696
        %v742 = vrot.slane %v741, 4
        %v743 = vmax.f32 %v741, %v742
        %v744 = vrot.slane %v743, 2
        %v745 = vmax.f32 %v743, %v744
        %v746 = vrot.slane %v745, 1
        %v747 = vmax.f32 %v745, %v746
        %v748 = vmax.f32 %v697, %v698
        %v749 = vrot.slane %v748, 4
        %v750 = vmax.f32 %v748, %v749
        %v751 = vrot.slane %v750, 2
        %v752 = vmax.f32 %v750, %v751
        %v753 = vrot.slane %v752, 1
        %v754 = vmax.f32 %v752, %v753
        %v755 = vsub.f32 %v683, %v705
        %v756 = vsub.f32 %v684, %v705
        %v757 = vsub.f32 %v685, %v712
        %v758 = vsub.f32 %v686, %v712
        %v759 = vsub.f32 %v687, %v719
        %v760 = vsub.f32 %v688, %v719
        %v761 = vsub.f32 %v689, %v726
        %v762 = vsub.f32 %v690, %v726
        %v763 = vsub.f32 %v691, %v733
        %v764 = vsub.f32 %v692, %v733
        %v765 = vsub.f32 %v693, %v740
        %v766 = vsub.f32 %v694, %v740
        %v767 = vsub.f32 %v695, %v747
        %v768 = vsub.f32 %v696, %v747
        %v769 = vsub.f32 %v697, %v754
        %v770 = vsub.f32 %v698, %v754
        %v771 = vmul.f32 %v755, 1.442695
        %v772 = vpow.pop %v771
        %v773 = vmul.f32 %v756, 1.442695
        %v774 = vpow.pop %v773
        %v775 = vmul.f32 %v757, 1.442695
        %v776 = vpow.pop %v775
        %v777 = vmul.f32 %v758, 1.442695
        %v778 = vpow.pop %v777
        %v779 = vmul.f32 %v759, 1.442695
        %v780 = vpow.pop %v779
        %v781 = vmul.f32 %v760, 1.442695
        %v782 = vpow.pop %v781
        %v783 = vmul.f32 %v761, 1.442695
        %v784 = vpow.pop %v783
        %v785 = vmul.f32 %v762, 1.442695
        %v786 = vpow.pop %v785
        %v787 = vmul.f32 %v763, 1.442695
        %v788 = vpow.pop %v787
        %v789 = vmul.f32 %v764, 1.442695
        %v790 = vpow.pop %v789
        %v791 = vmul.f32 %v765, 1.442695
        %v792 = vpow.pop %v791
        %v793 = vmul.f32 %v766, 1.442695
        %v794 = vpow.pop %v793
        %v795 = vmul.f32 %v767, 1.442695
        %v796 = vpow.pop %v795
        %v797 = vmul.f32 %v768, 1.442695
        %v798 = vpow.pop %v797
        %v799 = vmul.f32 %v769, 1.442695
        %v800 = vpow.pop %v799
        %v801 = vmul.f32 %v770, 1.442695
        %v802 = vpow.pop %v801
        %v803 = vadd.f32 %v772, %v774
        %v804 = vrot.slane %v803, 4
        %v805 = vadd.f32 %v803, %v804
        %v806 = vrot.slane %v805, 2
        %v807 = vadd.f32 %v805, %v806
        %v808 = vrot.slane %v807, 1
        %v809 = vadd.f32 %v807, %v808
        %v810 = vadd.f32 %v776, %v778
        %v811 = vrot.slane %v810, 4
        %v812 = vadd.f32 %v810, %v811
        %v813 = vrot.slane %v812, 2
        %v814 = vadd.f32 %v812, %v813
        %v815 = vrot.slane %v814, 1
        %v816 = vadd.f32 %v814, %v815
        %v817 = vadd.f32 %v780, %v782
        %v818 = vrot.slane %v817, 4
        %v819 = vadd.f32 %v817, %v818
        %v820 = vrot.slane %v819, 2
        %v821 = vadd.f32 %v819, %v820
        %v822 = vrot.slane %v821, 1
        %v823 = vadd.f32 %v821, %v822
        %v824 = vadd.f32 %v784, %v786
        %v825 = vrot.slane %v824, 4
        %v826 = vadd.f32 %v824, %v825
        %v827 = vrot.slane %v826, 2
        %v828 = vadd.f32 %v826, %v827
        %v829 = vrot.slane %v828, 1
        %v830 = vadd.f32 %v828, %v829
        %v831 = vadd.f32 %v788, %v790
        %v832 = vrot.slane %v831, 4
        %v833 = vadd.f32 %v831, %v832
        %v834 = vrot.slane %v833, 2
        %v835 = vadd.f32 %v833, %v834
        %v836 = vrot.slane %v835, 1
        %v837 = vadd.f32 %v835, %v836
        %v838 = vadd.f32 %v792, %v794
        %v839 = vrot.slane %v838, 4
        %v840 = vadd.f32 %v838, %v839
        %v841 = vrot.slane %v840, 2
        %v842 = vadd.f32 %v840, %v841
        %v843 = vrot.slane %v842, 1
        %v844 = vadd.f32 %v842, %v843
        %v845 = vadd.f32 %v796, %v798
        %v846 = vrot.slane %v845, 4
        %v847 = vadd.f32 %v845, %v846
        %v848 = vrot.slane %v847, 2
        %v849 = vadd.f32 %v847, %v848
        %v850 = vrot.slane %v849, 1
        %v851 = vadd.f32 %v849, %v850
        %v852 = vadd.f32 %v800, %v802
        %v853 = vrot.slane %v852, 4
        %v854 = vadd.f32 %v852, %v853
        %v855 = vrot.slane %v854, 2
        %v856 = vadd.f32 %v854, %v855
        %v857 = vrot.slane %v856, 1
        %v858 = vadd.f32 %v856, %v857
        %v859 = vrcp.pop %v809
        %v860 = vrcp.pop %v816
        %v861 = vrcp.pop %v823
        %v862 = vrcp.pop %v830
        %v863 = vrcp.pop %v837
        %v864 = vrcp.pop %v844
        %v865 = vrcp.pop %v851
        %v866 = vrcp.pop %v858
        %v867 = vmul.f32 %v772, %v859
        %v868 = vmul.f32 %v774, %v859
        %v869 = vmul.f32 %v776, %v860
        %v870 = vmul.f32 %v778, %v860
        %v871 = vmul.f32 %v780, %v861
        %v872 = vmul.f32 %v782, %v861
        %v873 = vmul.f32 %v784, %v862
        %v874 = vmul.f32 %v786, %v862
        %v875 = vmul.f32 %v788, %v863
        %v876 = vmul.f32 %v790, %v863
        %v877 = vmul.f32 %v792, %v864
        %v878 = vmul.f32 %v794, %v864
        %v879 = vmul.f32 %v796, %v865
        %v880 = vmul.f32 %v798, %v865
        %v881 = vmul.f32 %v800, %v866
        %v882 = vmul.f32 %v802, %v866
        %v883 = vadd.f32 %v867, %v869
        %v884 = vadd.f32 %v883, %v871
        %v885 = vadd.f32 %v884, %v873
        %v886 = vadd.f32 %v885, %v875
        %v887 = vadd.f32 %v886, %v877
        %v888 = vadd.f32 %v887, %v879
        %v889 = vadd.f32 %v888, %v881
        %v890 = vadd.f32 %v868, %v870
        %v891 = vadd.f32 %v890, %v872
        %v892 = vadd.f32 %v891, %v874
        %v893 = vadd.f32 %v892, %v876
        %v894 = vadd.f32 %v893, %v878
        %v895 = vadd.f32 %v894, %v880
        %v896 = vadd.f32 %v895, %v882
        %v897 = vmul.f32 %v322, %v889
        %v898 = vmul.f32 %v323, %v896
        %899 = vst [vmem:[%s320] sm:$0xff] %v897
        %900 = vst [vmem:[%s320 + $0x8] sm:$0xff] %v898
        %s901 = sand.u32 %s149, 1
        %s902 = scalar_lea.sflag [#allocation4], %s901
        %s903 = sand.u32 %s149, 1
        %s904 = smul.addr %s903, 16
        %s905 = scalar_lea.vmem [#allocation11], %s904
        // Predicated region
        $region61: #{tpu_custom_call.1} parent=39 // pred_check
          %p906 = pneg %p159
        $region62: #{tpu_custom_call.1} parent=39 // pred_check_branch
          %908 = sbr.rel (%p906) target = $region64
        $region63: #{tpu_custom_call.1} parent=39 // pred_region
          %s910 = ssub.s32 256, 256
          %911 = vsyncadd %s902, %s910
          %s912 = smul.addr %s26, 2
          %s913 = smul.addr %s912, 128
          %s914 = scalar_lea.hbm %s5, %s913
          %s915 = sshll.u32 %s905, 4
          %s916 = int_to_ptr.vmem [resolvable:$true] %s915
          %921 = dma.vmem_to_hbm [thread:$0]  %s916, 256, %s914, %s902, 128, 128, 8
        $region64: #{tpu_custom_call.1} parent=39 // pred_fallthru
          _
      $region40: #{tpu_custom_call.1} parent=5 // pred_fallthru
        _
      %p922 = scmp.le.s32.totalorder 2, %s21
      // Predicated region
      $region65: #{tpu_custom_call.1} parent=5 // pred_check
        %p923 = pneg %p922
      $region66: #{tpu_custom_call.1} parent=5 // pred_check_branch
        %925 = sbr.rel (%p923) target = $region68
      $region67: #{tpu_custom_call.1} parent=5 // pred_region
        %s926 = ssub.s32 %s21, 2
        // Predicated region
        $region69: #{tpu_custom_call.1} parent=67 // pred_check
          %p927 = pneg %p165
        $region70: #{tpu_custom_call.1} parent=67 // pred_check_branch
          %929 = sbr.rel (%p927) target = $region72
        $region71: #{tpu_custom_call.1} parent=67 // pred_region
          %s930 = sand.u32 %s150, 1
          %s931 = scalar_lea.sflag [#allocation4], %s930
          %s932 = sand.u32 %s150, 1
          %s933 = smul.addr %s932, 16
          %s934 = scalar_lea.vmem [#allocation11], %s933
          %935 = dma.done %s931, 256
        $region72: #{tpu_custom_call.1} parent=67 // pred_fallthru
          _
      $region68: #{tpu_custom_call.1} parent=5 // pred_fallthru
        _
    $region6: #{tpu_custom_call.1} parent=1 // loop_footer
      %s25 = sadd.s32 1, %s21
    $region7: #{tpu_custom_call.1} parent=1 // loop_footer_branch
      %20 = sbr.rel target = $region3
    $region8: #{tpu_custom_call.1} parent=1 // loop_exit
      _
    %936 = vsyncpa [#allocation3], 1
    %s937 = scalar_lea.sflag [#allocation3], 1
    %938 = vsyncpa %s937, 1
    %939 = vsyncpa [#allocation6], 1
    %s940 = scalar_lea.sflag [#allocation6], 1
    %941 = vsyncpa %s940, 1
    %942 = vsyncpa [#allocation9], 1
    %943 = vsyncpa [#allocation4], 1
    %s944 = scalar_lea.sflag [#allocation4], 1
    %945 = vsyncpa %s944, 1

</llo_original>
